<compile_context>
chip_gen: v5e
topology: v5e:2x2
jax: 0.10.0
libtpu: 0.0.40
codegen_flags: <defaults>
</compile_context>

<pallas_src>
import functools

import jax
import jax.numpy as jnp
from jax import lax
from jax.experimental import pallas as pl
from jax.experimental.pallas import tpu as pltpu


LN_EPS = 1e-5                 # torch.nn.LayerNorm default eps
OUT_PAD = 128                 # packed output width: [slip | force | zero pad]
_DEFAULT_TILE_CAP = 16 << 20  # per-buffer cap for the streamed latent tile


# ----------------------------------------------------------------------------
# Kernel
# ----------------------------------------------------------------------------
def _slip_force_kernel(
    latent_ref,   # (TB, TN, D) input dtype -- streamed batch/token tile
    ln_w_ref,     # (1, D)
    ln_b_ref,     # (1, D)
    w1_ref,       # (D, 2*D4)        fused [slip_fc1 | force_fc1]
    b1_ref,       # (1, 2*D4)
    w2_ref,       # (2*D4, OUT_PAD)  block-diag [slip_fc2 ; force_fc2], zero pad
    b2_ref,       # (1, OUT_PAD)
    out_ref,      # (TB, OUT_PAD) f32 lane-dense packed output
    acc_ref,      # scratch (TB, D) f32 token-sum accumulator
    *,
    n_tokens,     # true N (static)
    rem_tokens,   # valid tokens in the last (partial) tile; 0 => no masking
    d4,
    num_classes,
):
    k = pl.program_id(1)
    last_k = pl.num_programs(1) - 1

    @pl.when(k == 0)
    def _init():
        acc_ref[...] = jnp.zeros_like(acc_ref)

    # bf16 (or f32) stream -> f32 accumulation
    lat = latent_ref[...].astype(jnp.float32)

    if rem_tokens:
        # Mask only on the single partial tile; full tiles stay at one add/vreg.
        @pl.when(k < last_k)
        def _full_tiles():
            acc_ref[...] += jnp.sum(lat, axis=1)

        @pl.when(k == last_k)
        def _partial_tile():
            tok = lax.broadcasted_iota(jnp.int32, lat.shape, 1)
            acc_ref[...] += jnp.sum(jnp.where(tok < rem_tokens, lat, 0.0), axis=1)
    else:
        acc_ref[...] += jnp.sum(lat, axis=1)

    # --- finalize: mean, LayerNorm, fused heads (runs once per batch tile) ---
    @pl.when(k == last_k)
    def _finalize():
        x = acc_ref[...] * (1.0 / n_tokens)                    # mean pooling

        mu = jnp.mean(x, axis=-1, keepdims=True)               # LayerNorm
        xc = x - mu
        var = jnp.mean(xc * xc, axis=-1, keepdims=True)        # biased (torch)
        xn = xc * lax.rsqrt(var + LN_EPS)
        xn = xn * ln_w_ref[...] + ln_b_ref[...]
        # probe_dropout is Identity (dropout=0.0)

        # fused first layers: lanes [0:D4]->slip (sigmoid), [D4:2*D4]->force (relu)
        h = jnp.dot(xn, w1_ref[...], preferred_element_type=jnp.float32)
        h = h + b1_ref[...]
        col1 = lax.broadcasted_iota(jnp.int32, h.shape, 1)
        h = jnp.where(col1 < d4, jax.nn.sigmoid(h), jnp.maximum(h, 0.0))

        # fused second layers (block-diagonal), lane-dense 128-wide output
        y = jnp.dot(h, w2_ref[...], preferred_element_type=jnp.float32)
        y = y + b2_ref[...]
        col2 = lax.broadcasted_iota(jnp.int32, y.shape, 1)
        # hardtanh only on force lanes; slip lanes untouched; pad lanes are 0.
        out_ref[...] = jnp.where(col2 < num_classes, y, jnp.clip(y, -1.0, 1.0))


# ----------------------------------------------------------------------------
# Tiling / VMEM budgeting
# ----------------------------------------------------------------------------
def _usable_vmem_bytes():
    cap = 64 << 20                    # conservative default (v7x-sized)
    try:
        info = pltpu.get_tpu_info()
        for attr in ("vmem_capacity_bytes", "vmem_bytes", "vmem_size_bytes"):
            v = getattr(info, attr, None)
            if v:
                cap = int(v)
                break
    except Exception:
        pass
    return (cap * 3) // 4             # headroom for compiler-internal scratch


def _choose_tiles(B, N, D, itemsize, fixed_bytes, usable_vmem, tile_cap):
    """Pick (TB, TN) so 2 streamed latent tiles + constants always fit VMEM."""
    sub = 16 if itemsize == 2 else 8  # min sublane granularity on the token axis
    if B <= 8:
        tb_cands = [B]                # block dim == full array dim -> legal
    else:
        # >= 2 batch grid steps so both v7x TensorCores get work; TB mult. of 8.
        cap_tb = max(8, ((B // 2) // 8) * 8)
        tb_cands = [c for c in (512, 256, 128, 64, 32, 16, 8) if c <= cap_tb] or [8]
    for tb in tb_cands:
        overhead = fixed_bytes + 2 * tb * OUT_PAD * 4 + tb * D * 4 + (2 << 20)
        budget = min((usable_vmem - overhead) // 2, tile_cap)
        if budget < tb * min(N, sub) * D * itemsize:
            continue                  # even the minimum tile won't fit -> shrink TB
        if N <= sub:
            return tb, N
        max_tn = ((budget // (tb * D * itemsize)) // sub) * sub
        return (tb, N) if max_tn >= N else (tb, max_tn)
    # Last resort (extreme D): smallest legal tile.
    return (B if B <= 8 else 8), (N if N <= sub else sub)


# ----------------------------------------------------------------------------
# Wrapper
# ----------------------------------------------------------------------------
@functools.partial(
    jax.jit,
    static_argnames=("num_classes", "max_tile_bytes", "single_buffer_consts"))
def _slip_force_probe_impl(latent, params, num_classes, max_tile_bytes,
                           single_buffer_consts):
    B, N, D = latent.shape
    d4 = D // 4
    itemsize = jnp.dtype(latent.dtype).itemsize
    assert num_classes + 3 <= OUT_PAD

    # --- fuse head weights (tiny, folded under jit) --------------------------
    w1 = jnp.concatenate([params["ws1"], params["wf1"]], axis=1)      # (D, 2*D4)
    b1 = jnp.concatenate([params["bs1"], params["bf1"]], axis=1)      # (1, 2*D4)
    w2 = jnp.zeros((2 * d4, OUT_PAD), jnp.float32)
    w2 = w2.at[:d4, :num_classes].set(params["ws2"])
    w2 = w2.at[d4:, num_classes:num_classes + 3].set(params["wf2"])
    b2 = jnp.zeros((1, OUT_PAD), jnp.float32)
    b2 = b2.at[:, :num_classes].set(params["bs2"])
    b2 = b2.at[:, num_classes:num_classes + 3].set(params["bf2"])

    weight_bytes = (2 * D + D * 2 * d4 + 2 * d4 + 2 * d4 * OUT_PAD + OUT_PAD) * 4

    usable_vmem = _usable_vmem_bytes()
    tile_cap = _DEFAULT_TILE_CAP if max_tile_bytes is None else int(max_tile_bytes)
    # Weights counted twice (conservative) so the budget holds even if the
    # single-buffering request is ignored by the runtime.
    TB, TN = _choose_tiles(B, N, D, itemsize, 2 * weight_bytes, usable_vmem, tile_cap)

    grid = (pl.cdiv(B, TB), pl.cdiv(N, TN))
    rem_tokens = N % TN                       # static; 0 => no in-kernel masking

    lat_tile = TB * TN * D * itemsize
    vmem_need = (2 * lat_tile + 2 * weight_bytes
                 + 2 * TB * OUT_PAD * 4 + TB * D * 4)
    vmem_limit = int(min(max(vmem_need + (4 << 20), 32 << 20), usable_vmem))

    cost = pl.CostEstimate(
        flops=int(2 * B * N * D + 2 * B * D * (2 * d4)
                  + 2 * B * (2 * d4) * OUT_PAD + 10 * B * D),
        transcendentals=int(B * (2 * d4 + 1)),
        bytes_accessed=int(B * N * D * itemsize + weight_bytes + B * OUT_PAD * 4),
    )

    def _const_spec(shape):
        idx = lambda b, k: (0, 0)
        if single_buffer_consts:
            # Constant index_map -> single-buffer the weights (frees VMEM for
            # larger latent tiles; important for large D on v7x's 64 MiB VMEM).
            return pl.BlockSpec(shape, idx, pipeline_mode=pl.Buffered(1))
        return pl.BlockSpec(shape, idx)

    kernel = functools.partial(
        _slip_force_kernel,
        n_tokens=N, rem_tokens=rem_tokens, d4=d4, num_classes=num_classes)

    packed = pl.pallas_call(
        kernel,
        out_shape=jax.ShapeDtypeStruct((B, OUT_PAD), jnp.float32),
        grid_spec=pltpu.PrefetchScalarGridSpec(
            num_scalar_prefetch=0,
            grid=grid,
            in_specs=[
                pl.BlockSpec((TB, TN, D), lambda b, k: (b, k, 0)),
                _const_spec((1, D)),
                _const_spec((1, D)),
                _const_spec((D, 2 * d4)),
                _const_spec((1, 2 * d4)),
                _const_spec((2 * d4, OUT_PAD)),
                _const_spec((1, OUT_PAD)),
            ],
            out_specs=pl.BlockSpec((TB, OUT_PAD), lambda b, k: (b, 0)),
            scratch_shapes=[pltpu.VMEM((TB, D), jnp.float32)],
        ),
        compiler_params=pltpu.CompilerParams(
            dimension_semantics=("parallel", "arbitrary"),
            vmem_limit_bytes=vmem_limit,
        ),
        cost_estimate=cost,
    )(latent, params["ln_w"], params["ln_b"], w1, b1, w2, b2)

    return {
        "slip": packed[:, :num_classes],
        "force": packed[:, num_classes:num_classes + 3],
    }


def slip_force_probe(latent, params, num_classes=2, max_tile_bytes=None):
    """latent: (B, N, D) f32 or bf16.  Returns {'slip': (B, C), 'force': (B, 3)}."""
    try:
        return _slip_force_probe_impl(latent, params, num_classes,
                                      max_tile_bytes, True)
    except Exception:
        # Fallback: installed JAX rejected pipeline_mode=Buffered(1); rerun with
        # default (double-buffered) constant specs. Semantics are identical.
        return _slip_force_probe_impl(latent, params, num_classes,
                                      max_tile_bytes, False)


# ----------------------------------------------------------------------------
# Parameters & pure-JAX reference
# ----------------------------------------------------------------------------
def init_params(key, embed_dim, num_classes=2, init_std=0.02):
    """Deterministic synthetic parameters (not a checkpoint load)."""
    d4 = embed_dim // 4
    ks = jax.random.split(key, 8)
    f32 = jnp.float32
    return {
        # LayerNorm (fc_norm): weight=1, bias=0 (PyTorch default init)
        "ln_w": jnp.ones((1, embed_dim), f32),
        "ln_b": jnp.zeros((1, embed_dim), f32),
        # slip probe: Linear(D, D//4) -> Sigmoid -> Linear(D//4, num_classes)
        "ws1": init_std * jax.random.normal(ks[0], (embed_dim, d4), f32),
        "bs1": init_std * jax.random.normal(ks[1], (1, d4), f32),
        "ws2": init_std * jax.random.normal(ks[2], (d4, num_classes), f32),
        "bs2": init_std * jax.random.normal(ks[3], (1, num_classes), f32),
        # force probe: Linear(D, D//4) -> ReLU -> Linear(D//4, 3)
        "wf1": init_std * jax.random.normal(ks[4], (embed_dim, d4), f32),
        "bf1": init_std * jax.random.normal(ks[5], (1, d4), f32),
        "wf2": init_std * jax.random.normal(ks[6], (d4, 3), f32),
        "bf2": init_std * jax.random.normal(ks[7], (1, 3), f32),
    }


def _reference(latent, p):
    """Pure-JAX reference for correctness check."""
    x = jnp.mean(latent, axis=1)
    mu = jnp.mean(x, axis=-1, keepdims=True)
    var = jnp.mean((x - mu) ** 2, axis=-1, keepdims=True)
    xn = (x - mu) / jnp.sqrt(var + LN_EPS) * p["ln_w"] + p["ln_b"]
    h = jax.nn.sigmoid(xn @ p["ws1"] + p["bs1"])
    slip = h @ p["ws2"] + p["bs2"]
    g = jnp.maximum(xn @ p["wf1"] + p["bf1"], 0.0)
    force = jnp.clip(g @ p["wf2"] + p["bf2"], -1.0, 1.0)
    return {"slip": slip, "force": force}


def _check(out, ref, B, num_classes):
    # Tolerance note: at DEFAULT precision TPU f32 matmuls may use bf16 passes,
    # and Mosaic / XLA can round them differently; 5e-3 covers that while still
    # validating pooling, LayerNorm, activations, clipping and output packing.
    assert out["slip"].shape == (B, num_classes)
    assert out["force"].shape == (B, 3)
    assert jnp.allclose(out["slip"], ref["slip"], atol=5e-3, rtol=5e-3)
    assert jnp.allclose(out["force"], ref["force"], atol=5e-3, rtol=5e-3)


if __name__ == "__main__":
    NUM_CLASSES = 2
    key = jax.random.PRNGKey(0)
    k1, k2, k3, k4 = jax.random.split(key, 4)

    # Case 1: tiny shapes — single latent tile, batch block == full batch.
    B, N, D = 2, 8, 128
    latent = jax.random.normal(k1, (B, N, D), jnp.float32)
    params = init_params(k2, D, NUM_CLASSES)
    out = slip_force_probe(latent, params, num_classes=NUM_CLASSES)
    jax.block_until_ready(out)
    _check(out, _reference(latent, params), B, NUM_CLASSES)

    # Case 2: bf16-streamed latent (f32 accumulation inside the kernel).
    latent_bf = latent.astype(jnp.bfloat16)
    out_bf = slip_force_probe(latent_bf, params, num_classes=NUM_CLASSES)
    jax.block_until_ready(out_bf)
    _check(out_bf, _reference(latent_bf.astype(jnp.float32), params), B, NUM_CLASSES)

    # Case 3: forced small tiles — multi-step token reduction with a masked
    # partial token tile AND a partial batch block (B not a multiple of TB).
    B3, N3, D3 = 10, 44, 256
    latent3 = jax.random.normal(k3, (B3, N3, D3), jnp.float32)
    params3 = init_params(k4, D3, NUM_CLASSES)
    out3 = slip_force_probe(latent3, params3, num_classes=NUM_CLASSES,
                            max_tile_bytes=64 << 10)
    jax.block_until_ready(out3)
    _check(out3, _reference(latent3, params3), B3, NUM_CLASSES)

    # TODO(synk): attn_pool=True branch (AttentivePooler) not implemented;
    # the default forward path (attn_pool=False, mean pooling) is covered.
    print("KERNEL_OK")
</pallas_src>

<mosaic_0001>
module attributes {stable_mosaic.version = 11 : i64} {
  func.func @_slip_force_kernel(%arg0: i32, %arg1: i32, %arg2: memref<2x8x128xf32, #tpu.memory_space<vmem>>, %arg3: memref<1x128xf32, #tpu.memory_space<vmem>>, %arg4: memref<1x128xf32, #tpu.memory_space<vmem>>, %arg5: memref<128x64xf32, #tpu.memory_space<vmem>>, %arg6: memref<1x64xf32, #tpu.memory_space<vmem>>, %arg7: memref<64x128xf32, #tpu.memory_space<vmem>>, %arg8: memref<1x128xf32, #tpu.memory_space<vmem>>, %arg9: memref<2x128xf32, #tpu.memory_space<vmem>>, %arg10: memref<2x128xf32, #tpu.memory_space<vmem>>) attributes {dimension_semantics = [#tpu.dimension_semantics<parallel>, #tpu.dimension_semantics<arbitrary>], iteration_bounds = array<i64: 1, 1>, scalar_prefetch = 0 : i64, scratch_operands = 1 : i64, tpu.core_type = #tpu.core_type<tc>, window_params = [{transform_indices = @transform_0, window_bounds = array<i64: 2, 8, 128>}, {pipeline_mode = #tpu.pipeline_mode<synchronous>, transform_indices = @transform_1, window_bounds = array<i64: 1, 128>}, {pipeline_mode = #tpu.pipeline_mode<synchronous>, transform_indices = @transform_2, window_bounds = array<i64: 1, 128>}, {pipeline_mode = #tpu.pipeline_mode<synchronous>, transform_indices = @transform_3, window_bounds = array<i64: 128, 64>}, {pipeline_mode = #tpu.pipeline_mode<synchronous>, transform_indices = @transform_4, window_bounds = array<i64: 1, 64>}, {pipeline_mode = #tpu.pipeline_mode<synchronous>, transform_indices = @transform_5, window_bounds = array<i64: 64, 128>}, {pipeline_mode = #tpu.pipeline_mode<synchronous>, transform_indices = @transform_6, window_bounds = array<i64: 1, 128>}, {transform_indices = @transform_7, window_bounds = array<i64: 2, 128>}]} {
    %c0_i32 = arith.constant 0 : i32
    %0 = arith.cmpi eq, %arg1, %c0_i32 : i32
    %1 = arith.extui %0 : i1 to i32
    %c0_i32_0 = arith.constant 0 : i32
    %2 = arith.cmpi ne, %1, %c0_i32_0 : i32
    scf.if %2 {
      %cst_9 = arith.constant 0.000000e+00 : f32
      %11 = vector.broadcast %cst_9 : f32 to vector<2x128xf32>
      %c0_10 = arith.constant 0 : index
      %c0_11 = arith.constant 0 : index
      %12 = vector.load %arg10[%c0_10, %c0_11] : memref<2x128xf32, #tpu.memory_space<vmem>>, vector<2x128xf32>
      tpu.vector_store %arg10[%c0_10, %c0_11], %11 {strides = array<i32>} : memref<2x128xf32, #tpu.memory_space<vmem>>, vector<2x128xf32>,
    } else {
    }
    %c0 = arith.constant 0 : index
    %c0_1 = arith.constant 0 : index
    %c0_2 = arith.constant 0 : index
    %3 = vector.load %arg2[%c0, %c0_1, %c0_2] : memref<2x8x128xf32, #tpu.memory_space<vmem>>, vector<2x8x128xf32>
    %c0_3 = arith.constant 0 : index
    %c0_4 = arith.constant 0 : index
    %4 = vector.load %arg10[%c0_3, %c0_4] : memref<2x128xf32, #tpu.memory_space<vmem>>, vector<2x128xf32>
    %cst = arith.constant dense<0.000000e+00> : vector<2x128xf32>
    %5 = vector.multi_reduction <add>, %3, %cst [1] : vector<2x8x128xf32> to vector<2x128xf32>
    %6 = arith.addf %4, %5 : vector<2x128xf32>
    %c0_5 = arith.constant 0 : index
    %c0_6 = arith.constant 0 : index
    %7 = vector.load %arg10[%c0_5, %c0_6] : memref<2x128xf32, #tpu.memory_space<vmem>>, vector<2x128xf32>
    tpu.vector_store %arg10[%c0_5, %c0_6], %6 {strides = array<i32>} : memref<2x128xf32, #tpu.memory_space<vmem>>, vector<2x128xf32>,
    %c0_i32_7 = arith.constant 0 : i32
    %8 = arith.cmpi eq, %arg1, %c0_i32_7 : i32
    %9 = arith.extui %8 : i1 to i32
    %c0_i32_8 = arith.constant 0 : i32
    %10 = arith.cmpi ne, %9, %c0_i32_8 : i32
    scf.if %10 {
      %c0_9 = arith.constant 0 : index
      %c0_10 = arith.constant 0 : index
      %11 = vector.load %arg10[%c0_9, %c0_10] : memref<2x128xf32, #tpu.memory_space<vmem>>, vector<2x128xf32>
      %cst_11 = arith.constant 1.250000e-01 : f32
      %12 = vector.broadcast %cst_11 : f32 to vector<2x128xf32>
      %13 = arith.mulf %11, %12 : vector<2x128xf32>
      %cst_12 = arith.constant dense<0.000000e+00> : vector<2xf32>
      %14 = vector.multi_reduction <add>, %13, %cst_12 [1] : vector<2x128xf32> to vector<2xf32>
      %15 = vector.shape_cast %14 : vector<2xf32> to vector<2x1xf32>
      %cst_13 = arith.constant 1.280000e+02 : f32
      %16 = vector.broadcast %cst_13 : f32 to vector<2x1xf32>
      %17 = arith.divf %15, %16 : vector<2x1xf32>
      %18 = vector.broadcast %17 : vector<2x1xf32> to vector<2x128xf32>
      %19 = arith.subf %13, %18 : vector<2x128xf32>
      %20 = arith.mulf %19, %19 : vector<2x128xf32>
      %cst_14 = arith.constant dense<0.000000e+00> : vector<2xf32>
      %21 = vector.multi_reduction <add>, %20, %cst_14 [1] : vector<2x128xf32> to vector<2xf32>
      %22 = vector.shape_cast %21 : vector<2xf32> to vector<2x1xf32>
      %cst_15 = arith.constant 1.280000e+02 : f32
      %23 = vector.broadcast %cst_15 : f32 to vector<2x1xf32>
      %24 = arith.divf %22, %23 : vector<2x1xf32>
      %cst_16 = arith.constant 9.99999974E-6 : f32
      %25 = vector.broadcast %cst_16 : f32 to vector<2x1xf32>
      %26 = arith.addf %24, %25 : vector<2x1xf32>
      %27 = math.rsqrt %26 : vector<2x1xf32>
      %28 = vector.broadcast %27 : vector<2x1xf32> to vector<2x128xf32>
      %29 = arith.mulf %19, %28 : vector<2x128xf32>
      %c0_17 = arith.constant 0 : index
      %c0_18 = arith.constant 0 : index
      %30 = vector.load %arg3[%c0_17, %c0_18] : memref<1x128xf32, #tpu.memory_space<vmem>>, vector<1x128xf32>
      %31 = vector.broadcast %30 : vector<1x128xf32> to vector<2x128xf32>
      %32 = arith.mulf %29, %31 : vector<2x128xf32>
      %c0_19 = arith.constant 0 : index
      %c0_20 = arith.constant 0 : index
      %33 = vector.load %arg4[%c0_19, %c0_20] : memref<1x128xf32, #tpu.memory_space<vmem>>, vector<1x128xf32>
      %34 = vector.broadcast %33 : vector<1x128xf32> to vector<2x128xf32>
      %35 = arith.addf %32, %34 : vector<2x128xf32>
      %c0_21 = arith.constant 0 : index
      %c0_22 = arith.constant 0 : index
      %36 = vector.load %arg5[%c0_21, %c0_22] : memref<128x64xf32, #tpu.memory_space<vmem>>, vector<128x64xf32>
      %cst_23 = arith.constant dense<0.000000e+00> : vector<2x64xf32>
      %37 = tpu.matmul %35, %36, %cst_23 {dimension_numbers = #tpu.dot_dimension_numbers<[1], [0], [0], [1], [0, 0, 1, 1], [], []>} : vector<2x128xf32>, vector<128x64xf32>, vector<2x64xf32> -> vector<2x64xf32>
      %c0_24 = arith.constant 0 : index
      %c0_25 = arith.constant 0 : index
      %38 = vector.load %arg6[%c0_24, %c0_25] : memref<1x64xf32, #tpu.memory_space<vmem>>, vector<1x64xf32>
      %39 = vector.broadcast %38 : vector<1x64xf32> to vector<2x64xf32>
      %40 = arith.addf %37, %39 : vector<2x64xf32>
      %41 = tpu.iota {dimensions = array<i32: 1>} : vector<2x64xi32>
      %c32_i32 = arith.constant 32 : i32
      %42 = vector.broadcast %c32_i32 : i32 to vector<2x64xi32>
      %43 = arith.cmpi slt, %41, %42 : vector<2x64xi32>
      %44 = arith.negf %40 : vector<2x64xf32>
      %45 = math.exp %44 : vector<2x64xf32>
      %cst_26 = arith.constant 1.000000e+00 : f32
      %46 = vector.broadcast %cst_26 : f32 to vector<2x64xf32>
      %47 = arith.addf %46, %45 : vector<2x64xf32>
      %48 = arith.divf %46, %47 : vector<2x64xf32>
      %cst_27 = arith.constant 0.000000e+00 : f32
      %49 = vector.broadcast %cst_27 : f32 to vector<2x64xf32>
      %50 = arith.maximumf %40, %49 : vector<2x64xf32>
      %51 = arith.select %43, %48, %50 : vector<2x64xi1>, vector<2x64xf32>
      %c0_28 = arith.constant 0 : index
      %c0_29 = arith.constant 0 : index
      %52 = vector.load %arg7[%c0_28, %c0_29] : memref<64x128xf32, #tpu.memory_space<vmem>>, vector<64x128xf32>
      %cst_30 = arith.constant dense<0.000000e+00> : vector<2x128xf32>
      %53 = tpu.matmul %51, %52, %cst_30 {dimension_numbers = #tpu.dot_dimension_numbers<[1], [0], [0], [1], [0, 0, 1, 1], [], []>} : vector<2x64xf32>, vector<64x128xf32>, vector<2x128xf32> -> vector<2x128xf32>
      %c0_31 = arith.constant 0 : index
      %c0_32 = arith.constant 0 : index
      %54 = vector.load %arg8[%c0_31, %c0_32] : memref<1x128xf32, #tpu.memory_space<vmem>>, vector<1x128xf32>
      %55 = vector.broadcast %54 : vector<1x128xf32> to vector<2x128xf32>
      %56 = arith.addf %53, %55 : vector<2x128xf32>
      %57 = tpu.iota {dimensions = array<i32: 1>} : vector<2x128xi32>
      %c2_i32 = arith.constant 2 : i32
      %58 = vector.broadcast %c2_i32 : i32 to vector<2x128xi32>
      %59 = arith.cmpi slt, %57, %58 : vector<2x128xi32>
      %cst_33 = arith.constant -1.000000e+00 : f32
      %cst_34 = arith.constant 1.000000e+00 : f32
      %60 = vector.broadcast %cst_33 : f32 to vector<2x128xf32>
      %61 = arith.maximumf %60, %56 : vector<2x128xf32>
      %62 = vector.broadcast %cst_34 : f32 to vector<2x128xf32>
      %63 = arith.minimumf %62, %61 : vector<2x128xf32>
      %64 = arith.select %59, %56, %63 : vector<2x128xi1>, vector<2x128xf32>
      %c0_35 = arith.constant 0 : index
      %c0_36 = arith.constant 0 : index
      %65 = vector.load %arg9[%c0_35, %c0_36] : memref<2x128xf32, #tpu.memory_space<vmem>>, vector<2x128xf32>
      tpu.vector_store %arg9[%c0_35, %c0_36], %64 {strides = array<i32>} : memref<2x128xf32, #tpu.memory_space<vmem>>, vector<2x128xf32>,
    } else {
    }
    return
  }
  func.func @transform_0(%arg0: i32, %arg1: i32) -> (i32, i32, i32) {
    %c0_i32 = arith.constant 0 : i32
    %c0_i32_0 = arith.constant 0 : i32
    return %arg0, %arg1, %c0_i32 : i32, i32, i32
  }
  func.func @transform_1(%arg0: i32, %arg1: i32) -> (i32, i32) {
    %c0_i32 = arith.constant 0 : i32
    %c0_i32_0 = arith.constant 0 : i32
    %c0_i32_1 = arith.constant 0 : i32
    return %c0_i32, %c0_i32_0 : i32, i32
  }
  func.func @transform_2(%arg0: i32, %arg1: i32) -> (i32, i32) {
    %c0_i32 = arith.constant 0 : i32
    %c0_i32_0 = arith.constant 0 : i32
    %c0_i32_1 = arith.constant 0 : i32
    return %c0_i32, %c0_i32_0 : i32, i32
  }
  func.func @transform_3(%arg0: i32, %arg1: i32) -> (i32, i32) {
    %c0_i32 = arith.constant 0 : i32
    %c0_i32_0 = arith.constant 0 : i32
    %c0_i32_1 = arith.constant 0 : i32
    return %c0_i32, %c0_i32_0 : i32, i32
  }
  func.func @transform_4(%arg0: i32, %arg1: i32) -> (i32, i32) {
    %c0_i32 = arith.constant 0 : i32
    %c0_i32_0 = arith.constant 0 : i32
    %c0_i32_1 = arith.constant 0 : i32
    return %c0_i32, %c0_i32_0 : i32, i32
  }
  func.func @transform_5(%arg0: i32, %arg1: i32) -> (i32, i32) {
    %c0_i32 = arith.constant 0 : i32
    %c0_i32_0 = arith.constant 0 : i32
    %c0_i32_1 = arith.constant 0 : i32
    return %c0_i32, %c0_i32_0 : i32, i32
  }
  func.func @transform_6(%arg0: i32, %arg1: i32) -> (i32, i32) {
    %c0_i32 = arith.constant 0 : i32
    %c0_i32_0 = arith.constant 0 : i32
    %c0_i32_1 = arith.constant 0 : i32
    return %c0_i32, %c0_i32_0 : i32, i32
  }
  func.func @transform_7(%arg0: i32, %arg1: i32) -> (i32, i32) {
    %c0_i32 = arith.constant 0 : i32
    %c0_i32_0 = arith.constant 0 : i32
    return %arg0, %c0_i32 : i32, i32
  }
}

module attributes {stable_mosaic.version = 11 : i64} {
  func.func @_slip_force_kernel(%arg0: i32, %arg1: i32, %arg2: memref<2x8x128xf32, #tpu.memory_space<vmem>>, %arg3: memref<1x128xf32, #tpu.memory_space<vmem>>, %arg4: memref<1x128xf32, #tpu.memory_space<vmem>>, %arg5: memref<128x64xf32, #tpu.memory_space<vmem>>, %arg6: memref<1x64xf32, #tpu.memory_space<vmem>>, %arg7: memref<64x128xf32, #tpu.memory_space<vmem>>, %arg8: memref<1x128xf32, #tpu.memory_space<vmem>>, %arg9: memref<2x128xf32, #tpu.memory_space<vmem>>, %arg10: memref<2x128xf32, #tpu.memory_space<vmem>>) attributes {dimension_semantics = [#tpu.dimension_semantics<parallel>, #tpu.dimension_semantics<arbitrary>], iteration_bounds = array<i64: 1, 1>, scalar_prefetch = 0 : i64, scratch_operands = 1 : i64, tpu.core_type = #tpu.core_type<tc>, window_params = [{transform_indices = @transform_0, window_bounds = array<i64: 2, 8, 128>}, {pipeline_mode = #tpu.pipeline_mode<synchronous>, transform_indices = @transform_1, window_bounds = array<i64: 1, 128>}, {pipeline_mode = #tpu.pipeline_mode<synchronous>, transform_indices = @transform_2, window_bounds = array<i64: 1, 128>}, {pipeline_mode = #tpu.pipeline_mode<synchronous>, transform_indices = @transform_3, window_bounds = array<i64: 128, 64>}, {pipeline_mode = #tpu.pipeline_mode<synchronous>, transform_indices = @transform_4, window_bounds = array<i64: 1, 64>}, {pipeline_mode = #tpu.pipeline_mode<synchronous>, transform_indices = @transform_5, window_bounds = array<i64: 64, 128>}, {pipeline_mode = #tpu.pipeline_mode<synchronous>, transform_indices = @transform_6, window_bounds = array<i64: 1, 128>}, {transform_indices = @transform_7, window_bounds = array<i64: 2, 128>}]} {
    %c0_i32 = arith.constant 0 : i32
    %0 = arith.cmpi eq, %arg1, %c0_i32 : i32
    %1 = arith.extui %0 : i1 to i32
    %c0_i32_0 = arith.constant 0 : i32
    %2 = arith.cmpi ne, %1, %c0_i32_0 : i32
    scf.if %2 {
      %cst_9 = arith.constant 0.000000e+00 : f32
      %11 = vector.broadcast %cst_9 : f32 to vector<2x128xf32>
      %c0_10 = arith.constant 0 : index
      %c0_11 = arith.constant 0 : index
      %12 = vector.load %arg10[%c0_10, %c0_11] : memref<2x128xf32, #tpu.memory_space<vmem>>, vector<2x128xf32>
      tpu.vector_store %arg10[%c0_10, %c0_11], %11 {strides = array<i32>} : memref<2x128xf32, #tpu.memory_space<vmem>>, vector<2x128xf32>,
    } else {
    }
    %c0 = arith.constant 0 : index
    %c0_1 = arith.constant 0 : index
    %c0_2 = arith.constant 0 : index
    %3 = vector.load %arg2[%c0, %c0_1, %c0_2] : memref<2x8x128xf32, #tpu.memory_space<vmem>>, vector<2x8x128xf32>
    %c0_3 = arith.constant 0 : index
    %c0_4 = arith.constant 0 : index
    %4 = vector.load %arg10[%c0_3, %c0_4] : memref<2x128xf32, #tpu.memory_space<vmem>>, vector<2x128xf32>
    %cst = arith.constant dense<0.000000e+00> : vector<2x128xf32>
    %5 = vector.multi_reduction <add>, %3, %cst [1] : vector<2x8x128xf32> to vector<2x128xf32>
    %6 = arith.addf %4, %5 : vector<2x128xf32>
    %c0_5 = arith.constant 0 : index
    %c0_6 = arith.constant 0 : index
    %7 = vector.load %arg10[%c0_5, %c0_6] : memref<2x128xf32, #tpu.memory_space<vmem>>, vector<2x128xf32>
    tpu.vector_store %arg10[%c0_5, %c0_6], %6 {strides = array<i32>} : memref<2x128xf32, #tpu.memory_space<vmem>>, vector<2x128xf32>,
    %c0_i32_7 = arith.constant 0 : i32
    %8 = arith.cmpi eq, %arg1, %c0_i32_7 : i32
    %9 = arith.extui %8 : i1 to i32
    %c0_i32_8 = arith.constant 0 : i32
    %10 = arith.cmpi ne, %9, %c0_i32_8 : i32
    scf.if %10 {
      %c0_9 = arith.constant 0 : index
      %c0_10 = arith.constant 0 : index
      %11 = vector.load %arg10[%c0_9, %c0_10] : memref<2x128xf32, #tpu.memory_space<vmem>>, vector<2x128xf32>
      %cst_11 = arith.constant 1.250000e-01 : f32
      %12 = vector.broadcast %cst_11 : f32 to vector<2x128xf32>
      %13 = arith.mulf %11, %12 : vector<2x128xf32>
      %cst_12 = arith.constant dense<0.000000e+00> : vector<2xf32>
      %14 = vector.multi_reduction <add>, %13, %cst_12 [1] : vector<2x128xf32> to vector<2xf32>
      %15 = vector.shape_cast %14 : vector<2xf32> to vector<2x1xf32>
      %cst_13 = arith.constant 1.280000e+02 : f32
      %16 = vector.broadcast %cst_13 : f32 to vector<2x1xf32>
      %17 = arith.divf %15, %16 : vector<2x1xf32>
      %18 = vector.broadcast %17 : vector<2x1xf32> to vector<2x128xf32>
      %19 = arith.subf %13, %18 : vector<2x128xf32>
      %20 = arith.mulf %19, %19 : vector<2x128xf32>
      %cst_14 = arith.constant dense<0.000000e+00> : vector<2xf32>
      %21 = vector.multi_reduction <add>, %20, %cst_14 [1] : vector<2x128xf32> to vector<2xf32>
      %22 = vector.shape_cast %21 : vector<2xf32> to vector<2x1xf32>
      %cst_15 = arith.constant 1.280000e+02 : f32
      %23 = vector.broadcast %cst_15 : f32 to vector<2x1xf32>
      %24 = arith.divf %22, %23 : vector<2x1xf32>
      %cst_16 = arith.constant 9.99999974E-6 : f32
      %25 = vector.broadcast %cst_16 : f32 to vector<2x1xf32>
      %26 = arith.addf %24, %25 : vector<2x1xf32>
      %27 = math.rsqrt %26 : vector<2x1xf32>
      %28 = vector.broadcast %27 : vector<2x1xf32> to vector<2x128xf32>
      %29 = arith.mulf %19, %28 : vector<2x128xf32>
      %c0_17 = arith.constant 0 : index
      %c0_18 = arith.constant 0 : index
      %30 = vector.load %arg3[%c0_17, %c0_18] : memref<1x128xf32, #tpu.memory_space<vmem>>, vector<1x128xf32>
      %31 = vector.broadcast %30 : vector<1x128xf32> to vector<2x128xf32>
      %32 = arith.mulf %29, %31 : vector<2x128xf32>
      %c0_19 = arith.constant 0 : index
      %c0_20 = arith.constant 0 : index
      %33 = vector.load %arg4[%c0_19, %c0_20] : memref<1x128xf32, #tpu.memory_space<vmem>>, vector<1x128xf32>
      %34 = vector.broadcast %33 : vector<1x128xf32> to vector<2x128xf32>
      %35 = arith.addf %32, %34 : vector<2x128xf32>
      %c0_21 = arith.constant 0 : index
      %c0_22 = arith.constant 0 : index
      %36 = vector.load %arg5[%c0_21, %c0_22] : memref<128x64xf32, #tpu.memory_space<vmem>>, vector<128x64xf32>
      %cst_23 = arith.constant dense<0.000000e+00> : vector<2x64xf32>
      %37 = tpu.matmul %35, %36, %cst_23 {dimension_numbers = #tpu.dot_dimension_numbers<[1], [0], [0], [1], [0, 0, 1, 1], [], []>} : vector<2x128xf32>, vector<128x64xf32>, vector<2x64xf32> -> vector<2x64xf32>
      %c0_24 = arith.constant 0 : index
      %c0_25 = arith.constant 0 : index
      %38 = vector.load %arg6[%c0_24, %c0_25] : memref<1x64xf32, #tpu.memory_space<vmem>>, vector<1x64xf32>
      %39 = vector.broadcast %38 : vector<1x64xf32> to vector<2x64xf32>
      %40 = arith.addf %37, %39 : vector<2x64xf32>
      %41 = tpu.iota {dimensions = array<i32: 1>} : vector<2x64xi32>
      %c32_i32 = arith.constant 32 : i32
      %42 = vector.broadcast %c32_i32 : i32 to vector<2x64xi32>
      %43 = arith.cmpi slt, %41, %42 : vector<2x64xi32>
      %44 = arith.negf %40 : vector<2x64xf32>
      %45 = math.exp %44 : vector<2x64xf32>
      %cst_26 = arith.constant 1.000000e+00 : f32
      %46 = vector.broadcast %cst_26 : f32 to vector<2x64xf32>
      %47 = arith.addf %46, %45 : vector<2x64xf32>
      %48 = arith.divf %46, %47 : vector<2x64xf32>
      %cst_27 = arith.constant 0.000000e+00 : f32
      %49 = vector.broadcast %cst_27 : f32 to vector<2x64xf32>
      %50 = arith.maximumf %40, %49 : vector<2x64xf32>
      %51 = arith.select %43, %48, %50 : vector<2x64xi1>, vector<2x64xf32>
      %c0_28 = arith.constant 0 : index
      %c0_29 = arith.constant 0 : index
      %52 = vector.load %arg7[%c0_28, %c0_29] : memref<64x128xf32, #tpu.memory_space<vmem>>, vector<64x128xf32>
      %cst_30 = arith.constant dense<0.000000e+00> : vector<2x128xf32>
      %53 = tpu.matmul %51, %52, %cst_30 {dimension_numbers = #tpu.dot_dimension_numbers<[1], [0], [0], [1], [0, 0, 1, 1], [], []>} : vector<2x64xf32>, vector<64x128xf32>, vector<2x128xf32> -> vector<2x128xf32>
      %c0_31 = arith.constant 0 : index
      %c0_32 = arith.constant 0 : index
      %54 = vector.load %arg8[%c0_31, %c0_32] : memref<1x128xf32, #tpu.memory_space<vmem>>, vector<1x128xf32>
      %55 = vector.broadcast %54 : vector<1x128xf32> to vector<2x128xf32>
      %56 = arith.addf %53, %55 : vector<2x128xf32>
      %57 = tpu.iota {dimensions = array<i32: 1>} : vector<2x128xi32>
      %c2_i32 = arith.constant 2 : i32
      %58 = vector.broadcast %c2_i32 : i32 to vector<2x128xi32>
      %59 = arith.cmpi slt, %57, %58 : vector<2x128xi32>
      %cst_33 = arith.constant -1.000000e+00 : f32
      %cst_34 = arith.constant 1.000000e+00 : f32
      %60 = vector.broadcast %cst_33 : f32 to vector<2x128xf32>
      %61 = arith.maximumf %60, %56 : vector<2x128xf32>
      %62 = vector.broadcast %cst_34 : f32 to vector<2x128xf32>
      %63 = arith.minimumf %62, %61 : vector<2x128xf32>
      %64 = arith.select %59, %56, %63 : vector<2x128xi1>, vector<2x128xf32>
      %c0_35 = arith.constant 0 : index
      %c0_36 = arith.constant 0 : index
      %65 = vector.load %arg9[%c0_35, %c0_36] : memref<2x128xf32, #tpu.memory_space<vmem>>, vector<2x128xf32>
      tpu.vector_store %arg9[%c0_35, %c0_36], %64 {strides = array<i32>} : memref<2x128xf32, #tpu.memory_space<vmem>>, vector<2x128xf32>,
    } else {
    }
    return
  }
  func.func @transform_0(%arg0: i32, %arg1: i32) -> (i32, i32, i32) {
    %c0_i32 = arith.constant 0 : i32
    %c0_i32_0 = arith.constant 0 : i32
    return %arg0, %arg1, %c0_i32 : i32, i32, i32
  }
  func.func @transform_1(%arg0: i32, %arg1: i32) -> (i32, i32) {
    %c0_i32 = arith.constant 0 : i32
    %c0_i32_0 = arith.constant 0 : i32
    %c0_i32_1 = arith.constant 0 : i32
    return %c0_i32, %c0_i32_0 : i32, i32
  }
  func.func @transform_2(%arg0: i32, %arg1: i32) -> (i32, i32) {
    %c0_i32 = arith.constant 0 : i32
    %c0_i32_0 = arith.constant 0 : i32
    %c0_i32_1 = arith.constant 0 : i32
    return %c0_i32, %c0_i32_0 : i32, i32
  }
  func.func @transform_3(%arg0: i32, %arg1: i32) -> (i32, i32) {
    %c0_i32 = arith.constant 0 : i32
    %c0_i32_0 = arith.constant 0 : i32
    %c0_i32_1 = arith.constant 0 : i32
    return %c0_i32, %c0_i32_0 : i32, i32
  }
  func.func @transform_4(%arg0: i32, %arg1: i32) -> (i32, i32) {
    %c0_i32 = arith.constant 0 : i32
    %c0_i32_0 = arith.constant 0 : i32
    %c0_i32_1 = arith.constant 0 : i32
    return %c0_i32, %c0_i32_0 : i32, i32
  }
  func.func @transform_5(%arg0: i32, %arg1: i32) -> (i32, i32) {
    %c0_i32 = arith.constant 0 : i32
    %c0_i32_0 = arith.constant 0 : i32
    %c0_i32_1 = arith.constant 0 : i32
    return %c0_i32, %c0_i32_0 : i32, i32
  }
  func.func @transform_6(%arg0: i32, %arg1: i32) -> (i32, i32) {
    %c0_i32 = arith.constant 0 : i32
    %c0_i32_0 = arith.constant 0 : i32
    %c0_i32_1 = arith.constant 0 : i32
    return %c0_i32, %c0_i32_0 : i32, i32
  }
  func.func @transform_7(%arg0: i32, %arg1: i32) -> (i32, i32) {
    %c0_i32 = arith.constant 0 : i32
    %c0_i32_0 = arith.constant 0 : i32
    return %arg0, %c0_i32 : i32, i32
  }
}

</mosaic_0001>

<llo_original>
// kernel: _slip_force_probe_impl.1
$region0: #{_slip_force_probe_impl.1}
  #allocation0 [shape = 'u32[]', space=smem, size = 0x4, offset = 0x4, fixed_abs, tag = 'smem constant byte address 0x4 - core index']
  #allocation1 [shape = 'u32[72,128]{1,0:T(1,128)}', space=vmem, size = 0x9000, scoped, tag = 'internal scratch']
  #allocation2 [shape = 'f32[2,128]{1,0:T(2,128)}', space=vmem, size = 0x400, scoped, tag = 'scratch operand']
  %s0 = inlined_call_operand.vmem [shape: f32[2,8,128], index: 0, kind: input, shape index: {}]
  %s1 = inlined_call_operand.vmem [shape: f32[1,128], index: 1, kind: input, shape index: {}]
  %s2 = inlined_call_operand.vmem [shape: f32[1,128], index: 2, kind: input, shape index: {}]
  %s3 = inlined_call_operand.vmem [shape: f32[128,64], index: 3, kind: input, shape index: {}]
  %s4 = inlined_call_operand.vmem [shape: f32[1,64], index: 4, kind: input, shape index: {}]
  %s5 = inlined_call_operand.vmem [shape: f32[64,128], index: 5, kind: input, shape index: {}]
  %s6 = inlined_call_operand.vmem [shape: f32[1,128], index: 6, kind: input, shape index: {}]
  %s7 = inlined_call_operand.vmem [shape: f32[2,128], index: 7, kind: output, shape index: {}]
  %s8 = sld [smem:[#allocation0]]
  $region46: #{_slip_force_probe_impl.1} parent=0
    _
  %s10 = ssub.s32 1, %s8
  %s11 = scalar_select 0, %s10, %s8
  // Predicated region
  $region2: #{_slip_force_probe_impl.1} parent=0 // pred_check
    _
  $region3: #{_slip_force_probe_impl.1} parent=0 // pred_check_branch
    %13 = sbr.rel (0) target = $region5
  $region4: #{_slip_force_probe_impl.1} parent=0 // pred_region
    _
  $region5: #{_slip_force_probe_impl.1} parent=0 // pred_fallthru
    _
  // Predicated region
  $region6: #{_slip_force_probe_impl.1} parent=0 // pred_check
    _
  $region7: #{_slip_force_probe_impl.1} parent=0 // pred_check_branch
    %15 = sbr.rel (0) target = $region9
  $region8: #{_slip_force_probe_impl.1} parent=0 // pred_region
    _
  $region9: #{_slip_force_probe_impl.1} parent=0 // pred_fallthru
    _
  // Predicated region
  $region10: #{_slip_force_probe_impl.1} parent=0 // pred_check
    _
  $region11: #{_slip_force_probe_impl.1} parent=0 // pred_check_branch
    %17 = sbr.rel (0) target = $region13
  $region12: #{_slip_force_probe_impl.1} parent=0 // pred_region
    _
  $region13: #{_slip_force_probe_impl.1} parent=0 // pred_fallthru
    _
  // Predicated region
  $region14: #{_slip_force_probe_impl.1} parent=0 // pred_check
    _
  $region15: #{_slip_force_probe_impl.1} parent=0 // pred_check_branch
    %19 = sbr.rel (0) target = $region17
  $region16: #{_slip_force_probe_impl.1} parent=0 // pred_region
    _
  $region17: #{_slip_force_probe_impl.1} parent=0 // pred_fallthru
    _
  // Predicated region
  $region18: #{_slip_force_probe_impl.1} parent=0 // pred_check
    _
  $region19: #{_slip_force_probe_impl.1} parent=0 // pred_check_branch
    %21 = sbr.rel (0) target = $region21
  $region20: #{_slip_force_probe_impl.1} parent=0 // pred_region
    _
  $region21: #{_slip_force_probe_impl.1} parent=0 // pred_fallthru
    _
  // Predicated region
  $region22: #{_slip_force_probe_impl.1} parent=0 // pred_check
    _
  $region23: #{_slip_force_probe_impl.1} parent=0 // pred_check_branch
    %23 = sbr.rel (0) target = $region25
  $region24: #{_slip_force_probe_impl.1} parent=0 // pred_region
    _
  $region25: #{_slip_force_probe_impl.1} parent=0 // pred_fallthru
    _
  // Predicated region
  $region26: #{_slip_force_probe_impl.1} parent=0 // pred_check
    _
  $region27: #{_slip_force_probe_impl.1} parent=0 // pred_check_branch
    %25 = sbr.rel (0) target = $region29
  $region28: #{_slip_force_probe_impl.1} parent=0 // pred_region
    _
  $region29: #{_slip_force_probe_impl.1} parent=0 // pred_fallthru
    _
  %p26 = scmp.eq.s32.totalorder 0, 0
  // Predicated region
  $region30: #{_slip_force_probe_impl.1} parent=0 // pred_check
    %p27 = pneg %p26
  $region31: #{_slip_force_probe_impl.1} parent=0 // pred_check_branch
    %29 = sbr.rel (%p27) target = $region33
  $region32: #{_slip_force_probe_impl.1} parent=0 // pred_region
    %30 = vst [vmem:[#allocation2] sm:$0x3] 0.0
  $region33: #{_slip_force_probe_impl.1} parent=0 // pred_fallthru
    _
  %v31 = vld [vmem:[%s0] sm:$0xff]
  %v32 = vld [vmem:[%s0 + $0x8] sm:$0xff]
  %v33 = vld [vmem:[#allocation2] sm:$0x3]
  %v34 = vrot.slane %v31, 4
  %v35 = vadd.f32 %v31, %v34
  %v36 = vrot.slane %v35, 2
  %v37 = vadd.f32 %v35, %v36
  %v38 = vrot.slane %v37, 1
  %v39 = vadd.f32 %v37, %v38
  %v40 = vrot.slane %v32, 4
  %v41 = vadd.f32 %v32, %v40
  %v42 = vrot.slane %v41, 2
  %v43 = vadd.f32 %v41, %v42
  %v44 = vrot.slane %v43, 1
  %v45 = vadd.f32 %v43, %v44
  %vm48 = vcmask 1041409
  %v49 = vsel %vm48, %v45, %v39
  %v51 = vadd.f32 %v33, %v49
  %52 = vst [vmem:[#allocation2] sm:$0x3] %v51
  // Predicated region
  $region34: #{_slip_force_probe_impl.1} parent=0 // pred_check
    %p53 = pneg %p26
  $region35: #{_slip_force_probe_impl.1} parent=0 // pred_check_branch
    %55 = sbr.rel (%p53) target = $region37
  $region36: #{_slip_force_probe_impl.1} parent=0 // pred_region
    %v56 = vld [vmem:[#allocation2] sm:$0x3]
    %v57 = vmul.f32 %v56, 0.125
    %vm58 = vcmask 1041408
    %v59 = vsel %vm58, %v57, 0.0
    %60 = vadd.xlane.f32.xlu0 %v59
    %v61 = vpop.xlane.xlu0 %60
    %v62 = vrcp.pop 128.0
    %v63 = vmul.f32 128.0, %v62
    %v64 = vsub.f32 1.0, %v63
    %v65 = vmul.f32 %v62, %v64
    %v66 = vadd.f32 %v62, %v65
    %vm67 = vweird.f32 %v62
    %v68 = vsel %vm67, %v62, %v66
    %v69 = vmul.f32 %v61, %v68
    %v70 = vsub.f32 %v57, %v69
    %v71 = vmul.f32 %v70, %v70
    %v72 = vsel %vm58, %v71, 0.0
    %73 = vadd.xlane.f32.xlu0 %v72
    %v74 = vpop.xlane.xlu0 %73
    %v75 = vmul.f32 %v74, %v68
    %v76 = vadd.f32 %v75, 1e-05
    %v77 = vrsqrt.pop %v76
    %v78 = vmul.f32 %v77, %v76
    %v79 = vmul.f32 %v78, %v77
    %v80 = vmul.f32 0.5, %v79
    %v81 = vsub.f32 1.5, %v80
    %v82 = vmul.f32 %v77, %v81
    %vm83 = vweird.f32 %v76
    %vm84 = vweird.f32 %v77
    %vm85 = vmor %vm83, %vm84
    %v86 = vsel %vm85, %v77, %v82
    %v87 = vmul.f32 %v70, %v86
    %v88 = vld [vmem:[%s1] sm:$0x1]
    %v90 = vperm.slane %v88, 0
    %v92 = vmul.f32 %v87, %v90
    %v93 = vld [vmem:[%s2] sm:$0x1]
    %v95 = vperm.slane %v93, 0
    %v97 = vadd.f32 %v92, %v95
    %v98 = vld [vmem:[%s3] sm:$0xff]
    %v99 = vld [vmem:[%s3 + $0x8] sm:$0xff]
    %v100 = vld [vmem:[%s3 + $0x10] sm:$0xff]
    %v101 = vld [vmem:[%s3 + $0x18] sm:$0xff]
    %v102 = vld [vmem:[%s3 + $0x20] sm:$0xff]
    %v103 = vld [vmem:[%s3 + $0x28] sm:$0xff]
    %v104 = vld [vmem:[%s3 + $0x30] sm:$0xff]
    %v105 = vld [vmem:[%s3 + $0x38] sm:$0xff]
    %v106 = vld [vmem:[%s3 + $0x40] sm:$0xff]
    %v107 = vld [vmem:[%s3 + $0x48] sm:$0xff]
    %v108 = vld [vmem:[%s3 + $0x50] sm:$0xff]
    %v109 = vld [vmem:[%s3 + $0x58] sm:$0xff]
    %v110 = vld [vmem:[%s3 + $0x60] sm:$0xff]
    %v111 = vld [vmem:[%s3 + $0x68] sm:$0xff]
    %v112 = vld [vmem:[%s3 + $0x70] sm:$0xff]
    %v113 = vld [vmem:[%s3 + $0x78] sm:$0xff]
    %v114 = vld [vmem:[%s4] sm:$0x1]
    %v116 = vperm.slane %v114, 0
    %118 = vmatpush.msra.mxu0 %v113
    %119 = vmatpush.msra.mxu0 %v112
    %120 = vmatpush.msra.mxu0 %v111
    %121 = vmatpush.msra.mxu0 %v110
    %122 = vmatpush.msra.mxu0 %v109
    %123 = vmatpush.msra.mxu0 %v108
    %124 = vmatpush.msra.mxu0 %v107
    %125 = vmatpush.msra.mxu0 %v106
    %126 = vmatpush.msra.mxu0 %v105
    %127 = vmatpush.msra.mxu0 %v104
    %128 = vmatpush.msra.mxu0 %v103
    %129 = vmatpush.msra.mxu0 %v102
    %130 = vmatpush.msra.mxu0 %v101
    %131 = vmatpush.msra.mxu0 %v100
    %132 = vmatpush.msra.mxu0 %v99
    %133 = vmatpush.msra.mxu0 %v98
    %134 = vmatmul.f32.gmra.mxu0 %v97
    %v135 = vpop.f32.mrf.mxu0
    %v136 = vadd.f32 %v116, %v135
    %137 = vdwg.mxu0
    %v138 = vlaneseq
    %v139 = vand.u32 %v138, 127
    %vm140 = vcmp.lt.s32.totalorder %v139, 32
    %v141 = vxor.u32 %v136, 2147483648
    %v142 = vmul.f32 %v141, 1.442695
    %v143 = vpow.pop %v142
    %v144 = vadd.f32 %v143, 1.0
    %v145 = vrcp.pop %v144
    %v146 = vmul.f32 %v144, %v145
    %v147 = vsub.f32 1.0, %v146
    %v148 = vmul.f32 %v145, %v147
    %v149 = vadd.f32 %v145, %v148
    %vm150 = vweird.f32 %v144
    %vm151 = vweird.f32 %v145
    %vm152 = vmor %vm150, %vm151
    %v153 = vsel %vm152, %v145, %v149
    %v154 = vand.u32 2147483647, %v144
    %vm155 = vcmp.eq.f32.partialorder %v154, 8.507059e+37
    %v156 = vand.u32 %v144, 2147483648
    %v157 = vor.u32 1.1754944e-38, %v156
    %v158 = vsel %vm155, %v157, %v153
    %v159 = vmul.f32 1.0, %v158
    %v160 = vmax.f32 %v136, 0.0
    %v161 = vsel %vm140, %v159, %v160
    %v162 = vld [vmem:[%s5] sm:$0xff]
    %v163 = vld [vmem:[%s5 + $0x8] sm:$0xff]
    %v164 = vld [vmem:[%s5 + $0x10] sm:$0xff]
    %v165 = vld [vmem:[%s5 + $0x18] sm:$0xff]
    %v166 = vld [vmem:[%s5 + $0x20] sm:$0xff]
    %v167 = vld [vmem:[%s5 + $0x28] sm:$0xff]
    %v168 = vld [vmem:[%s5 + $0x30] sm:$0xff]
    %v169 = vld [vmem:[%s5 + $0x38] sm:$0xff]
    %v170 = vld [vmem:[%s6] sm:$0x1]
    %v172 = vperm.slane %v170, 0
    %vm174 = vcmask 523264
    %v176 = vsel %vm174, %v161, 0
    %178 = vmatpush.msra.mxu0 0.0
    %179 = vmatpush.msra.mxu0 0.0
    %180 = vmatpush.msra.mxu0 0.0
    %181 = vmatpush.msra.mxu0 0.0
    %182 = vmatpush.msra.mxu0 0.0
    %183 = vmatpush.msra.mxu0 0.0
    %184 = vmatpush.msra.mxu0 0.0
    %185 = vmatpush.msra.mxu0 0.0
    %186 = vmatpush.msra.mxu0 %v169
    %187 = vmatpush.msra.mxu0 %v168
    %188 = vmatpush.msra.mxu0 %v167
    %189 = vmatpush.msra.mxu0 %v166
    %190 = vmatpush.msra.mxu0 %v165
    %191 = vmatpush.msra.mxu0 %v164
    %192 = vmatpush.msra.mxu0 %v163
    %193 = vmatpush.msra.mxu0 %v162
    %194 = vmatmul.f32.gmra.mxu0 %v176
    %v195 = vpop.f32.mrf.mxu0
    %v196 = vadd.f32 %v172, %v195
    %197 = vdwg.mxu0
    %vm198 = vcmp.lt.s32.totalorder %v139, 2
    %v199 = vmax.f32 %v196, -1.0
    %v200 = vmin.f32 %v199, 1.0
    %v201 = vsel %vm198, %v196, %v200
    %202 = vst [vmem:[%s7] sm:$0x3] %v201
  $region37: #{_slip_force_probe_impl.1} parent=0 // pred_fallthru
    _
  // Predicated region
  $region38: #{_slip_force_probe_impl.1} parent=0 // pred_check
    _
  $region39: #{_slip_force_probe_impl.1} parent=0 // pred_check_branch
    %204 = sbr.rel (0) target = $region41
  $region40: #{_slip_force_probe_impl.1} parent=0 // pred_region
    _
  $region41: #{_slip_force_probe_impl.1} parent=0 // pred_fallthru
    _
  // Predicated region
  $region42: #{_slip_force_probe_impl.1} parent=0 // pred_check
    _
  $region43: #{_slip_force_probe_impl.1} parent=0 // pred_check_branch
    %206 = sbr.rel (0) target = $region45
  $region44: #{_slip_force_probe_impl.1} parent=0 // pred_region
    _
  $region45: #{_slip_force_probe_impl.1} parent=0 // pred_fallthru
    _

// kernel: _slip_force_probe_impl.1
$region0: #{_slip_force_probe_impl.1}
  #allocation0 [shape = 'u32[]', space=smem, size = 0x4, offset = 0x4, fixed_abs, tag = 'smem constant byte address 0x4 - core index']
  #allocation1 [shape = 'u32[72,128]{1,0:T(1,128)}', space=vmem, size = 0x9000, scoped, tag = 'internal scratch']
  #allocation2 [shape = 'f32[2,128]{1,0:T(2,128)}', space=vmem, size = 0x400, scoped, tag = 'scratch operand']
  %s0 = inlined_call_operand.vmem [shape: f32[2,8,128], index: 0, kind: input, shape index: {}]
  %s1 = inlined_call_operand.vmem [shape: f32[1,128], index: 1, kind: input, shape index: {}]
  %s2 = inlined_call_operand.vmem [shape: f32[1,128], index: 2, kind: input, shape index: {}]
  %s3 = inlined_call_operand.vmem [shape: f32[128,64], index: 3, kind: input, shape index: {}]
  %s4 = inlined_call_operand.vmem [shape: f32[1,64], index: 4, kind: input, shape index: {}]
  %s5 = inlined_call_operand.vmem [shape: f32[64,128], index: 5, kind: input, shape index: {}]
  %s6 = inlined_call_operand.vmem [shape: f32[1,128], index: 6, kind: input, shape index: {}]
  %s7 = inlined_call_operand.vmem [shape: f32[2,128], index: 7, kind: output, shape index: {}]
  %s8 = sld [smem:[#allocation0]]
  $region46: #{_slip_force_probe_impl.1} parent=0
    _
  %s10 = ssub.s32 1, %s8
  %s11 = scalar_select 0, %s10, %s8
  // Predicated region
  $region2: #{_slip_force_probe_impl.1} parent=0 // pred_check
    _
  $region3: #{_slip_force_probe_impl.1} parent=0 // pred_check_branch
    %13 = sbr.rel (0) target = $region5
  $region4: #{_slip_force_probe_impl.1} parent=0 // pred_region
    _
  $region5: #{_slip_force_probe_impl.1} parent=0 // pred_fallthru
    _
  // Predicated region
  $region6: #{_slip_force_probe_impl.1} parent=0 // pred_check
    _
  $region7: #{_slip_force_probe_impl.1} parent=0 // pred_check_branch
    %15 = sbr.rel (0) target = $region9
  $region8: #{_slip_force_probe_impl.1} parent=0 // pred_region
    _
  $region9: #{_slip_force_probe_impl.1} parent=0 // pred_fallthru
    _
  // Predicated region
  $region10: #{_slip_force_probe_impl.1} parent=0 // pred_check
    _
  $region11: #{_slip_force_probe_impl.1} parent=0 // pred_check_branch
    %17 = sbr.rel (0) target = $region13
  $region12: #{_slip_force_probe_impl.1} parent=0 // pred_region
    _
  $region13: #{_slip_force_probe_impl.1} parent=0 // pred_fallthru
    _
  // Predicated region
  $region14: #{_slip_force_probe_impl.1} parent=0 // pred_check
    _
  $region15: #{_slip_force_probe_impl.1} parent=0 // pred_check_branch
    %19 = sbr.rel (0) target = $region17
  $region16: #{_slip_force_probe_impl.1} parent=0 // pred_region
    _
  $region17: #{_slip_force_probe_impl.1} parent=0 // pred_fallthru
    _
  // Predicated region
  $region18: #{_slip_force_probe_impl.1} parent=0 // pred_check
    _
  $region19: #{_slip_force_probe_impl.1} parent=0 // pred_check_branch
    %21 = sbr.rel (0) target = $region21
  $region20: #{_slip_force_probe_impl.1} parent=0 // pred_region
    _
  $region21: #{_slip_force_probe_impl.1} parent=0 // pred_fallthru
    _
  // Predicated region
  $region22: #{_slip_force_probe_impl.1} parent=0 // pred_check
    _
  $region23: #{_slip_force_probe_impl.1} parent=0 // pred_check_branch
    %23 = sbr.rel (0) target = $region25
  $region24: #{_slip_force_probe_impl.1} parent=0 // pred_region
    _
  $region25: #{_slip_force_probe_impl.1} parent=0 // pred_fallthru
    _
  // Predicated region
  $region26: #{_slip_force_probe_impl.1} parent=0 // pred_check
    _
  $region27: #{_slip_force_probe_impl.1} parent=0 // pred_check_branch
    %25 = sbr.rel (0) target = $region29
  $region28: #{_slip_force_probe_impl.1} parent=0 // pred_region
    _
  $region29: #{_slip_force_probe_impl.1} parent=0 // pred_fallthru
    _
  %p26 = scmp.eq.s32.totalorder 0, 0
  // Predicated region
  $region30: #{_slip_force_probe_impl.1} parent=0 // pred_check
    %p27 = pneg %p26
  $region31: #{_slip_force_probe_impl.1} parent=0 // pred_check_branch
    %29 = sbr.rel (%p27) target = $region33
  $region32: #{_slip_force_probe_impl.1} parent=0 // pred_region
    %30 = vst [vmem:[#allocation2] sm:$0x3] 0.0
  $region33: #{_slip_force_probe_impl.1} parent=0 // pred_fallthru
    _
  %v31 = vld [vmem:[%s0] sm:$0xff]
  %v32 = vld [vmem:[%s0 + $0x8] sm:$0xff]
  %v33 = vld [vmem:[#allocation2] sm:$0x3]
  %v34 = vrot.slane %v31, 4
  %v35 = vadd.f32 %v31, %v34
  %v36 = vrot.slane %v35, 2
  %v37 = vadd.f32 %v35, %v36
  %v38 = vrot.slane %v37, 1
  %v39 = vadd.f32 %v37, %v38
  %v40 = vrot.slane %v32, 4
  %v41 = vadd.f32 %v32, %v40
  %v42 = vrot.slane %v41, 2
  %v43 = vadd.f32 %v41, %v42
  %v44 = vrot.slane %v43, 1
  %v45 = vadd.f32 %v43, %v44
  %vm48 = vcmask 1041409
  %v49 = vsel %vm48, %v45, %v39
  %v51 = vadd.f32 %v33, %v49
  %52 = vst [vmem:[#allocation2] sm:$0x3] %v51
  // Predicated region
  $region34: #{_slip_force_probe_impl.1} parent=0 // pred_check
    %p53 = pneg %p26
  $region35: #{_slip_force_probe_impl.1} parent=0 // pred_check_branch
    %55 = sbr.rel (%p53) target = $region37
  $region36: #{_slip_force_probe_impl.1} parent=0 // pred_region
    %v56 = vld [vmem:[#allocation2] sm:$0x3]
    %v57 = vmul.f32 %v56, 0.125
    %vm58 = vcmask 1041408
    %v59 = vsel %vm58, %v57, 0.0
    %60 = vadd.xlane.f32.xlu0 %v59
    %v61 = vpop.xlane.xlu0 %60
    %v62 = vrcp.pop 128.0
    %v63 = vmul.f32 128.0, %v62
    %v64 = vsub.f32 1.0, %v63
    %v65 = vmul.f32 %v62, %v64
    %v66 = vadd.f32 %v62, %v65
    %vm67 = vweird.f32 %v62
    %v68 = vsel %vm67, %v62, %v66
    %v69 = vmul.f32 %v61, %v68
    %v70 = vsub.f32 %v57, %v69
    %v71 = vmul.f32 %v70, %v70
    %v72 = vsel %vm58, %v71, 0.0
    %73 = vadd.xlane.f32.xlu0 %v72
    %v74 = vpop.xlane.xlu0 %73
    %v75 = vmul.f32 %v74, %v68
    %v76 = vadd.f32 %v75, 1e-05
    %v77 = vrsqrt.pop %v76
    %v78 = vmul.f32 %v77, %v76
    %v79 = vmul.f32 %v78, %v77
    %v80 = vmul.f32 0.5, %v79
    %v81 = vsub.f32 1.5, %v80
    %v82 = vmul.f32 %v77, %v81
    %vm83 = vweird.f32 %v76
    %vm84 = vweird.f32 %v77
    %vm85 = vmor %vm83, %vm84
    %v86 = vsel %vm85, %v77, %v82
    %v87 = vmul.f32 %v70, %v86
    %v88 = vld [vmem:[%s1] sm:$0x1]
    %v90 = vperm.slane %v88, 0
    %v92 = vmul.f32 %v87, %v90
    %v93 = vld [vmem:[%s2] sm:$0x1]
    %v95 = vperm.slane %v93, 0
    %v97 = vadd.f32 %v92, %v95
    %v98 = vld [vmem:[%s3] sm:$0xff]
    %v99 = vld [vmem:[%s3 + $0x8] sm:$0xff]
    %v100 = vld [vmem:[%s3 + $0x10] sm:$0xff]
    %v101 = vld [vmem:[%s3 + $0x18] sm:$0xff]
    %v102 = vld [vmem:[%s3 + $0x20] sm:$0xff]
    %v103 = vld [vmem:[%s3 + $0x28] sm:$0xff]
    %v104 = vld [vmem:[%s3 + $0x30] sm:$0xff]
    %v105 = vld [vmem:[%s3 + $0x38] sm:$0xff]
    %v106 = vld [vmem:[%s3 + $0x40] sm:$0xff]
    %v107 = vld [vmem:[%s3 + $0x48] sm:$0xff]
    %v108 = vld [vmem:[%s3 + $0x50] sm:$0xff]
    %v109 = vld [vmem:[%s3 + $0x58] sm:$0xff]
    %v110 = vld [vmem:[%s3 + $0x60] sm:$0xff]
    %v111 = vld [vmem:[%s3 + $0x68] sm:$0xff]
    %v112 = vld [vmem:[%s3 + $0x70] sm:$0xff]
    %v113 = vld [vmem:[%s3 + $0x78] sm:$0xff]
    %v114 = vld [vmem:[%s4] sm:$0x1]
    %v116 = vperm.slane %v114, 0
    %118 = vmatpush.msra.mxu0 %v113
    %119 = vmatpush.msra.mxu0 %v112
    %120 = vmatpush.msra.mxu0 %v111
    %121 = vmatpush.msra.mxu0 %v110
    %122 = vmatpush.msra.mxu0 %v109
    %123 = vmatpush.msra.mxu0 %v108
    %124 = vmatpush.msra.mxu0 %v107
    %125 = vmatpush.msra.mxu0 %v106
    %126 = vmatpush.msra.mxu0 %v105
    %127 = vmatpush.msra.mxu0 %v104
    %128 = vmatpush.msra.mxu0 %v103
    %129 = vmatpush.msra.mxu0 %v102
    %130 = vmatpush.msra.mxu0 %v101
    %131 = vmatpush.msra.mxu0 %v100
    %132 = vmatpush.msra.mxu0 %v99
    %133 = vmatpush.msra.mxu0 %v98
    %134 = vmatmul.f32.gmra.mxu0 %v97
    %v135 = vpop.f32.mrf.mxu0
    %v136 = vadd.f32 %v116, %v135
    %137 = vdwg.mxu0
    %v138 = vlaneseq
    %v139 = vand.u32 %v138, 127
    %vm140 = vcmp.lt.s32.totalorder %v139, 32
    %v141 = vxor.u32 %v136, 2147483648
    %v142 = vmul.f32 %v141, 1.442695
    %v143 = vpow.pop %v142
    %v144 = vadd.f32 %v143, 1.0
    %v145 = vrcp.pop %v144
    %v146 = vmul.f32 %v144, %v145
    %v147 = vsub.f32 1.0, %v146
    %v148 = vmul.f32 %v145, %v147
    %v149 = vadd.f32 %v145, %v148
    %vm150 = vweird.f32 %v144
    %vm151 = vweird.f32 %v145
    %vm152 = vmor %vm150, %vm151
    %v153 = vsel %vm152, %v145, %v149
    %v154 = vand.u32 2147483647, %v144
    %vm155 = vcmp.eq.f32.partialorder %v154, 8.507059e+37
    %v156 = vand.u32 %v144, 2147483648
    %v157 = vor.u32 1.1754944e-38, %v156
    %v158 = vsel %vm155, %v157, %v153
    %v159 = vmul.f32 1.0, %v158
    %v160 = vmax.f32 %v136, 0.0
    %v161 = vsel %vm140, %v159, %v160
    %v162 = vld [vmem:[%s5] sm:$0xff]
    %v163 = vld [vmem:[%s5 + $0x8] sm:$0xff]
    %v164 = vld [vmem:[%s5 + $0x10] sm:$0xff]
    %v165 = vld [vmem:[%s5 + $0x18] sm:$0xff]
    %v166 = vld [vmem:[%s5 + $0x20] sm:$0xff]
    %v167 = vld [vmem:[%s5 + $0x28] sm:$0xff]
    %v168 = vld [vmem:[%s5 + $0x30] sm:$0xff]
    %v169 = vld [vmem:[%s5 + $0x38] sm:$0xff]
    %v170 = vld [vmem:[%s6] sm:$0x1]
    %v172 = vperm.slane %v170, 0
    %vm174 = vcmask 523264
    %v176 = vsel %vm174, %v161, 0
    %178 = vmatpush.msra.mxu0 0.0
    %179 = vmatpush.msra.mxu0 0.0
    %180 = vmatpush.msra.mxu0 0.0
    %181 = vmatpush.msra.mxu0 0.0
    %182 = vmatpush.msra.mxu0 0.0
    %183 = vmatpush.msra.mxu0 0.0
    %184 = vmatpush.msra.mxu0 0.0
    %185 = vmatpush.msra.mxu0 0.0
    %186 = vmatpush.msra.mxu0 %v169
    %187 = vmatpush.msra.mxu0 %v168
    %188 = vmatpush.msra.mxu0 %v167
    %189 = vmatpush.msra.mxu0 %v166
    %190 = vmatpush.msra.mxu0 %v165
    %191 = vmatpush.msra.mxu0 %v164
    %192 = vmatpush.msra.mxu0 %v163
    %193 = vmatpush.msra.mxu0 %v162
    %194 = vmatmul.f32.gmra.mxu0 %v176
    %v195 = vpop.f32.mrf.mxu0
    %v196 = vadd.f32 %v172, %v195
    %197 = vdwg.mxu0
    %vm198 = vcmp.lt.s32.totalorder %v139, 2
    %v199 = vmax.f32 %v196, -1.0
    %v200 = vmin.f32 %v199, 1.0
    %v201 = vsel %vm198, %v196, %v200
    %202 = vst [vmem:[%s7] sm:$0x3] %v201
  $region37: #{_slip_force_probe_impl.1} parent=0 // pred_fallthru
    _
  // Predicated region
  $region38: #{_slip_force_probe_impl.1} parent=0 // pred_check
    _
  $region39: #{_slip_force_probe_impl.1} parent=0 // pred_check_branch
    %204 = sbr.rel (0) target = $region41
  $region40: #{_slip_force_probe_impl.1} parent=0 // pred_region
    _
  $region41: #{_slip_force_probe_impl.1} parent=0 // pred_fallthru
    _
  // Predicated region
  $region42: #{_slip_force_probe_impl.1} parent=0 // pred_check
    _
  $region43: #{_slip_force_probe_impl.1} parent=0 // pred_check_branch
    %206 = sbr.rel (0) target = $region45
  $region44: #{_slip_force_probe_impl.1} parent=0 // pred_region
    _
  $region45: #{_slip_force_probe_impl.1} parent=0 // pred_fallthru
    _

</llo_original>
